<compile_context>
chip_gen: v7x
topology: tpu7x:2x2x1
jax: 0.10.0
libtpu: 0.0.40
codegen_flags: <defaults>
</compile_context>

<pallas_src>
import math

import jax
import jax.numpy as jnp
from jax.experimental import pallas as pl
from jax.experimental.pallas import tpu as pltpu


def _dot_product_attention_kernel(enc_ref, hid_ref, out_ref):
    """One (TB, S, H) / (TB, H) / (TB, S) tile per grid step.

    enc_ref: (TB, S, H) VMEM tile of encoder_outputs
    hid_ref: (TB, H)    VMEM tile of hidden
    out_ref: (TB, S)    VMEM tile of attention weights
    """
    enc = enc_ref[...]                      # native dtype (bf16 stays bf16 on v6e/v7x)
    hid = hid_ref[...]
    h_dim = enc.shape[-1]

    # Fold the 1/sqrt(H) scale into hidden once (TB*H cheap muls) instead of
    # dividing every (TB, S) score.
    inv_sqrt_h = jnp.asarray(1.0 / math.sqrt(h_dim), dtype=hid.dtype)
    hid_scaled = hid * inv_sqrt_h           # (TB, H)

    # VPU broadcast-multiply in the input dtype; accumulate the lane reduction
    # in f32 (on v5e Mosaic upcasts the bf16 multiply itself — still correct).
    prod = (enc * hid_scaled[:, None, :]).astype(jnp.float32)   # (TB, S, H)
    scores = jnp.sum(prod, axis=-1)                              # (TB, S) f32

    # Numerically-stable softmax over the sequence axis.
    m = jnp.max(scores, axis=-1, keepdims=True)
    e = jnp.exp(scores - m)
    denom = jnp.sum(e, axis=-1, keepdims=True)
    weights = e * pl.reciprocal(denom, approx=True)   # divide -> EUP slot

    # nn.Dropout is identity at inference time.
    # TODO(synk): training-mode dropout (pltpu.prng_* mask + 1/(1-p) rescale) not applied.
    out_ref[...] = weights.astype(out_ref.dtype)


def dot_product_attention(encoder_outputs, hidden, *, vmem_budget_bytes=20 << 20):
    """encoder_outputs: (B, S, H), hidden: (B, H) -> (B, S) attention weights."""
    B, S, H = encoder_outputs.shape
    assert hidden.shape == (B, H)
    dtype = encoder_outputs.dtype
    itemsize = jnp.dtype(dtype).itemsize

    # --- choose TB: rows of the batch processed per grid step -------------------
    # Per row, double-buffered input/output tiles plus the in-kernel f32 product
    # scratch (the f32 upcast of the (TB, S, H) tile).
    bytes_per_row = 2 * (S * H + H + S) * itemsize + S * H * 4
    max_rows = max(8, (vmem_budget_bytes // max(bytes_per_row, 1)) // 8 * 8)
    b_pad = pl.cdiv(B, 8) * 8
    tb = min(max_rows, b_pad)
    # Prefer >= 2 grid steps so v7x's second TensorCore gets work.
    if b_pad // tb < 2 and b_pad >= 16:
        tb = max(8, ((b_pad // 2) // 8) * 8)
    n_steps = pl.cdiv(b_pad, tb)
    b_pad = n_steps * tb

    if b_pad != B:
        pad = b_pad - B
        encoder_outputs = jnp.pad(encoder_outputs, ((0, pad), (0, 0), (0, 0)))
        hidden = jnp.pad(hidden, ((0, pad), (0, 0)))

    cost = pl.CostEstimate(
        flops=2 * b_pad * S * H + 5 * b_pad * S,
        transcendentals=b_pad * S + b_pad,
        bytes_accessed=(b_pad * S * H + b_pad * H + b_pad * S) * itemsize,
    )

    out = pl.pallas_call(
        _dot_product_attention_kernel,
        out_shape=jax.ShapeDtypeStruct((b_pad, S), dtype),
        grid_spec=pltpu.PrefetchScalarGridSpec(
            num_scalar_prefetch=0,
            grid=(n_steps,),
            # Last two block dims are either multiples of 8 or the full array
            # extents, so tiles are sublane/lane-dense (no masked stores).
            in_specs=[
                pl.BlockSpec((tb, S, H), lambda i: (i, 0, 0)),
                pl.BlockSpec((tb, H), lambda i: (i, 0)),
            ],
            out_specs=pl.BlockSpec((tb, S), lambda i: (i, 0)),
        ),
        compiler_params=pltpu.CompilerParams(
            dimension_semantics=("parallel",),
            # 32 MiB scoped VMEM: >= default on v6e/v7x, raises v5e's 16 MiB
            # default; tiles are budgeted to ~20 MiB so this is safe on v7x too.
            vmem_limit_bytes=32 << 20,
        ),
        cost_estimate=cost,
    )(encoder_outputs, hidden)

    return out[:B]


def _reference(encoder_outputs, hidden):
    """Pure-JAX reference matching the PyTorch forward (eval mode)."""
    H = encoder_outputs.shape[2]
    scores = jnp.einsum("bh,bsh->bs", hidden, encoder_outputs) / math.sqrt(H)
    return jax.nn.softmax(scores, axis=-1)


if __name__ == "__main__":
    B, S, H = 2, 8, 32  # batch, sequence length, hidden dim

    key = jax.random.PRNGKey(0)
    k_enc, k_hid = jax.random.split(key)
    encoder_outputs = jax.random.normal(k_enc, (B, S, H), dtype=jnp.float32)
    hidden = jax.random.normal(k_hid, (B, H), dtype=jnp.float32)

    out = dot_product_attention(encoder_outputs, hidden)
    out = jax.block_until_ready(out)

    ref = _reference(encoder_outputs, hidden)
    assert out.shape == (B, S)
    # EUP approximate-reciprocal softmax normalization -> slightly looser tolerance.
    assert jnp.allclose(out, ref, atol=2e-3, rtol=2e-3)
    # rows of a softmax must sum to 1 (to approx-reciprocal precision)
    assert jnp.allclose(jnp.sum(out, axis=-1), jnp.ones((B,)), atol=2e-3)

    print("KERNEL_OK")
</pallas_src>

<mosaic_0001>
module attributes {stable_mosaic.version = 11 : i64} {
  func.func @_dot_product_attention_kernel(%arg0: i32, %arg1: memref<8x8x32xf32, #tpu.memory_space<vmem>>, %arg2: memref<8x32xf32, #tpu.memory_space<vmem>>, %arg3: memref<8x8xf32, #tpu.memory_space<vmem>>) attributes {dimension_semantics = [#tpu.dimension_semantics<parallel>], iteration_bounds = array<i64: 1>, scalar_prefetch = 0 : i64, scratch_operands = 0 : i64, tpu.core_type = #tpu.core_type<tc>, window_params = [{transform_indices = @transform_0, window_bounds = array<i64: 8, 8, 32>}, {transform_indices = @transform_1, window_bounds = array<i64: 8, 32>}, {transform_indices = @transform_2, window_bounds = array<i64: 8, 8>}]} {
    %c0 = arith.constant 0 : index
    %c0_0 = arith.constant 0 : index
    %c0_1 = arith.constant 0 : index
    %0 = vector.load %arg1[%c0, %c0_0, %c0_1] : memref<8x8x32xf32, #tpu.memory_space<vmem>>, vector<8x8x32xf32>
    %c0_2 = arith.constant 0 : index
    %c0_3 = arith.constant 0 : index
    %1 = vector.load %arg2[%c0_2, %c0_3] : memref<8x32xf32, #tpu.memory_space<vmem>>, vector<8x32xf32>
    %cst = arith.constant 0.176776692 : f32
    %2 = vector.broadcast %cst : f32 to vector<8x32xf32>
    %3 = arith.mulf %1, %2 : vector<8x32xf32>
    %4 = vector.shape_cast %3 : vector<8x32xf32> to vector<8x1x32xf32>
    %5 = vector.broadcast %4 : vector<8x1x32xf32> to vector<8x8x32xf32>
    %6 = arith.mulf %0, %5 : vector<8x8x32xf32>
    %cst_4 = arith.constant dense<0.000000e+00> : vector<8x8xf32>
    %7 = vector.multi_reduction <add>, %6, %cst_4 [2] : vector<8x8x32xf32> to vector<8x8xf32>
    %cst_5 = arith.constant dense<0xFF800000> : vector<8xf32>
    %8 = vector.multi_reduction <maximumf>, %7, %cst_5 [1] : vector<8x8xf32> to vector<8xf32>
    %9 = vector.shape_cast %8 : vector<8xf32> to vector<8x1xf32>
    %10 = vector.broadcast %9 : vector<8x1xf32> to vector<8x8xf32>
    %11 = arith.subf %7, %10 : vector<8x8xf32>
    %12 = math.exp %11 : vector<8x8xf32>
    %cst_6 = arith.constant dense<0.000000e+00> : vector<8xf32>
    %13 = vector.multi_reduction <add>, %12, %cst_6 [1] : vector<8x8xf32> to vector<8xf32>
    %14 = vector.shape_cast %13 : vector<8xf32> to vector<8x1xf32>
    %15 = tpu.reciprocal %14 {approx = true} : vector<8x1xf32> -> vector<8x1xf32>
    %16 = vector.broadcast %15 : vector<8x1xf32> to vector<8x8xf32>
    %17 = arith.mulf %12, %16 : vector<8x8xf32>
    %c0_7 = arith.constant 0 : index
    %c0_8 = arith.constant 0 : index
    %18 = vector.load %arg3[%c0_7, %c0_8] : memref<8x8xf32, #tpu.memory_space<vmem>>, vector<8x8xf32>
    tpu.vector_store %arg3[%c0_7, %c0_8], %17 {strides = array<i32>} : memref<8x8xf32, #tpu.memory_space<vmem>>, vector<8x8xf32>,
    return
  }
  func.func @transform_0(%arg0: i32) -> (i32, i32, i32) {
    %c0_i32 = arith.constant 0 : i32
    %c0_i32_0 = arith.constant 0 : i32
    %c0_i32_1 = arith.constant 0 : i32
    return %arg0, %c0_i32, %c0_i32_0 : i32, i32, i32
  }
  func.func @transform_1(%arg0: i32) -> (i32, i32) {
    %c0_i32 = arith.constant 0 : i32
    %c0_i32_0 = arith.constant 0 : i32
    return %arg0, %c0_i32 : i32, i32
  }
  func.func @transform_2(%arg0: i32) -> (i32, i32) {
    %c0_i32 = arith.constant 0 : i32
    %c0_i32_0 = arith.constant 0 : i32
    return %arg0, %c0_i32 : i32, i32
  }
}

</mosaic_0001>

<llo_original>
// kernel: tpu_custom_call.1
$region0: #{tpu_custom_call.1}
  #allocation0 [shape = 'u32[]', space=smem, size = 0x4, offset = 0x4, fixed_abs, tag = 'smem constant byte address 0x4 - core index']
  #allocation1 [shape = 'u32[144,128]{1,0:T(1,128)}', space=vmem, size = 0x12000, scoped, tag = 'internal scratch']
  %s0 = inlined_call_operand.hbm [shape: f32[8,8,32], index: 0, kind: input, shape index: {}]
  %s1 = inlined_call_operand.hbm [shape: f32[8,32], index: 1, kind: input, shape index: {}]
  %s2 = inlined_call_operand.hbm [shape: f32[8,8], index: 2, kind: output, shape index: {}]
  %s3 = sld [smem:[#allocation0]]
  $region26: #{tpu_custom_call.1} parent=0
    _
  %s5 = ssub.s32 1, %s3
  %s6 = scalar_select 0, %s5, %s3
  $region1: #{tpu_custom_call.1} parent=0
    #allocation2 [shape = 'u8[32768]{0}', space=vmem, size = 0x8000, scoped, tag = 'input window, operand 0, single buffered']
    #allocation3 [shape = 's32[1]{0}', space=sflag, size = 0x4, scoped, tag = 'scoped memory for tpu_custom_call.1']
    #allocation4 [shape = 's32[1]{0}', space=sflag, size = 0x4, scoped, tag = 'scoped memory for tpu_custom_call.1']
    #allocation5 [shape = 'u8[4096]{0}', space=vmem, size = 0x1000, scoped, tag = 'input window, operand 1, single buffered']
    #allocation6 [shape = 's32[1]{0}', space=sflag, size = 0x4, scoped, tag = 'scoped memory for tpu_custom_call.1']
    #allocation7 [shape = 'u8[4096]{0}', space=vmem, size = 0x1000, scoped, tag = 'output window, operand 0, single buffered']
    %7 = vsyncpa [#allocation3], 0
    %8 = vsyncpa [#allocation6], 0
    %9 = vsyncpa [#allocation4], 0
    // Predicated region
    $region2: #{tpu_custom_call.1} parent=1 // pred_check
      _
    $region3: #{tpu_custom_call.1} parent=1 // pred_check_branch
      %11 = sbr.rel (0) target = $region5
    $region4: #{tpu_custom_call.1} parent=1 // pred_region
      %s13 = ssub.s32 1024, 1024
      %14 = vsyncadd [#allocation3], %s13
      %s15 = sshll.u32 [#allocation2], 4
      %s16 = int_to_ptr.vmem [resolvable:$true] %s15
      %21 = dma.hbm_to_vmem [thread:$0]  %s0, 1024, %s16, [#allocation3], 128, 128, 8
    $region5: #{tpu_custom_call.1} parent=1 // pred_fallthru
      _
    // Predicated region
    $region6: #{tpu_custom_call.1} parent=1 // pred_check
      _
    $region7: #{tpu_custom_call.1} parent=1 // pred_check_branch
      %23 = sbr.rel (0) target = $region9
    $region8: #{tpu_custom_call.1} parent=1 // pred_region
      %s25 = ssub.s32 128, 128
      %26 = vsyncadd [#allocation6], %s25
      %s28 = sshll.u32 [#allocation5], 4
      %s29 = int_to_ptr.vmem [resolvable:$true] %s28
      %31 = dma.hbm_to_vmem [thread:$0]  %s1, 128, %s29, [#allocation6]
    $region9: #{tpu_custom_call.1} parent=1 // pred_fallthru
      _
    // Predicated region
    $region10: #{tpu_custom_call.1} parent=1 // pred_check
      _
    $region11: #{tpu_custom_call.1} parent=1 // pred_check_branch
      %33 = sbr.rel (0) target = $region13
    $region12: #{tpu_custom_call.1} parent=1 // pred_region
      %34 = dma.done [#allocation3], 1024
    $region13: #{tpu_custom_call.1} parent=1 // pred_fallthru
      _
    // Predicated region
    $region14: #{tpu_custom_call.1} parent=1 // pred_check
      _
    $region15: #{tpu_custom_call.1} parent=1 // pred_check_branch
      %36 = sbr.rel (0) target = $region17
    $region16: #{tpu_custom_call.1} parent=1 // pred_region
      %37 = dma.done [#allocation6], 128
    $region17: #{tpu_custom_call.1} parent=1 // pred_fallthru
      _
    %v38 = vld [vmem:[#allocation2] sm:$0xff]
    %v39 = vld [vmem:[#allocation2 + $0x8] sm:$0xff]
    %v40 = vld [vmem:[#allocation2 + $0x10] sm:$0xff]
    %v41 = vld [vmem:[#allocation2 + $0x18] sm:$0xff]
    %v42 = vld [vmem:[#allocation2 + $0x20] sm:$0xff]
    %v43 = vld [vmem:[#allocation2 + $0x28] sm:$0xff]
    %v44 = vld [vmem:[#allocation2 + $0x30] sm:$0xff]
    %v45 = vld [vmem:[#allocation2 + $0x38] sm:$0xff]
    %v46 = vld [vmem:[#allocation5] sm:$0xff]
    %v47 = vmul.f32 %v46, 0.17677669
    %v49 = vcombine.high %v47, %v47
    %v51 = vunpack.c.l.s4 1966171168
    %v52 = vunpack.c.0.s8 %v51
    %v53 = vlaneseq
    %v54 = vshrl.u32 %v53, 7
    %v55 = vsub.s32 %v52, %v54
    %v56 = vrot.slane %v47, %v55
    %v58 = vunpack.c.l.s4 1966171168
    %v59 = vunpack.c.0.s8 %v58
    %v60 = vlaneseq
    %v61 = vshrl.u32 %v60, 7
    %v62 = vsub.s32 %v59, %v61
    %v63 = vrot.slane %v49, %v62
    %v64 = vcombine.high %v56, %v56
    %v65 = vcombine.high %v63, %v63
    %v67 = vunpack.c.l.s4 1966171168
    %v68 = vunpack.c.0.s8 %v67
    %v69 = vlaneseq
    %v70 = vshrl.u32 %v69, 7
    %v71 = vsub.s32 %v68, %v70
    %v72 = vrot.slane %v56, %v71
    %v74 = vunpack.c.l.s4 1966171168
    %v75 = vunpack.c.0.s8 %v74
    %v76 = vlaneseq
    %v77 = vshrl.u32 %v76, 7
    %v78 = vsub.s32 %v75, %v77
    %v79 = vrot.slane %v63, %v78
    %v81 = vunpack.c.l.s4 1966171168
    %v82 = vunpack.c.0.s8 %v81
    %v83 = vlaneseq
    %v84 = vshrl.u32 %v83, 7
    %v85 = vsub.s32 %v82, %v84
    %v86 = vrot.slane %v64, %v85
    %v88 = vunpack.c.l.s4 1966171168
    %v89 = vunpack.c.0.s8 %v88
    %v90 = vlaneseq
    %v91 = vshrl.u32 %v90, 7
    %v92 = vsub.s32 %v89, %v91
    %v93 = vrot.slane %v65, %v92
    %v94 = vcombine.high %v72, %v72
    %v95 = vcombine.high %v79, %v79
    %v96 = vcombine.high %v86, %v86
    %v97 = vcombine.high %v93, %v93
    %v98 = vlaneseq
    %v99 = vshrl.u32 %v98, 7
    %v100 = vsub.s32 0, %v99
    %v101 = vrot.slane %v72, %v100
    %v102 = vlaneseq
    %v103 = vshrl.u32 %v102, 7
    %v104 = vsub.s32 0, %v103
    %v105 = vrot.slane %v86, %v104
    %v106 = vlaneseq
    %v107 = vshrl.u32 %v106, 7
    %v108 = vsub.s32 0, %v107
    %v109 = vrot.slane %v94, %v108
    %v110 = vlaneseq
    %v111 = vshrl.u32 %v110, 7
    %v112 = vsub.s32 0, %v111
    %v113 = vrot.slane %v96, %v112
    %v114 = vlaneseq
    %v115 = vshrl.u32 %v114, 7
    %v116 = vsub.s32 0, %v115
    %v117 = vrot.slane %v79, %v116
    %v118 = vlaneseq
    %v119 = vshrl.u32 %v118, 7
    %v120 = vsub.s32 0, %v119
    %v121 = vrot.slane %v93, %v120
    %v122 = vlaneseq
    %v123 = vshrl.u32 %v122, 7
    %v124 = vsub.s32 0, %v123
    %v125 = vrot.slane %v95, %v124
    %v126 = vlaneseq
    %v127 = vshrl.u32 %v126, 7
    %v128 = vsub.s32 0, %v127
    %v129 = vrot.slane %v97, %v128
    %v138 = vmul.f32 %v38, %v101
    %v139 = vmul.f32 %v39, %v105
    %v140 = vmul.f32 %v40, %v109
    %v141 = vmul.f32 %v41, %v113
    %v142 = vmul.f32 %v42, %v117
    %v143 = vmul.f32 %v43, %v121
    %v144 = vmul.f32 %v44, %v125
    %v145 = vmul.f32 %v45, %v129
    %vm146 = vcmask 261120
    %v147 = vsel %vm146, %v138, 0.0
    %148 = vadd.xlane.f32.xlu0 %v147
    %v149 = vpop.xlane.xlu0 %148
    %v150 = vsel %vm146, %v139, 0.0
    %151 = vadd.xlane.f32.xlu0 %v150
    %v152 = vpop.xlane.xlu0 %151
    %v153 = vsel %vm146, %v140, 0.0
    %154 = vadd.xlane.f32.xlu0 %v153
    %v155 = vpop.xlane.xlu0 %154
    %v156 = vsel %vm146, %v141, 0.0
    %157 = vadd.xlane.f32.xlu0 %v156
    %v158 = vpop.xlane.xlu0 %157
    %v159 = vsel %vm146, %v142, 0.0
    %160 = vadd.xlane.f32.xlu0 %v159
    %v161 = vpop.xlane.xlu0 %160
    %v162 = vsel %vm146, %v143, 0.0
    %163 = vadd.xlane.f32.xlu0 %v162
    %v164 = vpop.xlane.xlu0 %163
    %v165 = vsel %vm146, %v144, 0.0
    %166 = vadd.xlane.f32.xlu0 %v165
    %v167 = vpop.xlane.xlu0 %166
    %v168 = vsel %vm146, %v145, 0.0
    %169 = vadd.xlane.f32.xlu0 %v168
    %v170 = vpop.xlane.xlu0 %169
    %v179 = vlaneseq
    %v180 = vand.u32 %v179, 127
    %v181 = vlaneseq
    %v182 = vshrl.u32 %v181, 7
    %v183 = vsub.s32 %v180, %v182
    %v184 = vrot.slane %v149, %v183
    %v185 = vlaneseq
    %v186 = vshrl.u32 %v185, 7
    %v187 = vsub.s32 %v180, %v186
    %v188 = vrot.slane %v152, %v187
    %v189 = vlaneseq
    %v190 = vshrl.u32 %v189, 7
    %v191 = vsub.s32 %v180, %v190
    %v192 = vrot.slane %v155, %v191
    %v193 = vlaneseq
    %v194 = vshrl.u32 %v193, 7
    %v195 = vsub.s32 %v180, %v194
    %v196 = vrot.slane %v158, %v195
    %v197 = vlaneseq
    %v198 = vshrl.u32 %v197, 7
    %v199 = vsub.s32 %v180, %v198
    %v200 = vrot.slane %v161, %v199
    %v201 = vlaneseq
    %v202 = vshrl.u32 %v201, 7
    %v203 = vsub.s32 %v180, %v202
    %v204 = vrot.slane %v164, %v203
    %v205 = vlaneseq
    %v206 = vshrl.u32 %v205, 7
    %v207 = vsub.s32 %v180, %v206
    %v208 = vrot.slane %v167, %v207
    %v209 = vlaneseq
    %v210 = vshrl.u32 %v209, 7
    %v211 = vsub.s32 %v180, %v210
    %v212 = vrot.slane %v170, %v211
    %vm213 = vcmask 1041409
    %v214 = vsel %vm213, %v188, %v184
    %vm215 = vcmask 1042434
    %v216 = vsel %vm215, %v192, %v214
    %vm217 = vcmask 1043459
    %v218 = vsel %vm217, %v196, %v216
    %vm219 = vcmask 1044484
    %v220 = vsel %vm219, %v200, %v218
    %vm221 = vcmask 1045509
    %v222 = vsel %vm221, %v204, %v220
    %vm223 = vcmask 1046534
    %v224 = vsel %vm223, %v208, %v222
    %vm225 = vcmask 1047559
    %v226 = vsel %vm225, %v212, %v224
    %vm228 = vcmask 64512
    %v229 = vsel %vm228, %v226, -inf
    %230 = vmax.xlane.f32.xlu0 %v229
    %v231 = vpop.xlane.xlu0 %230
    %v233 = vlaneseq
    %v234 = vshrl.u32 %v233, 7
    %v235 = vsub.s32 0, %v234
    %v236 = vrot.slane %v231, %v235
    %v237 = vlaneseq
    %v238 = vshrl.u32 %v237, 7
    %v239 = vsub.s32 1, %v238
    %v240 = vrot.slane %v231, %v239
    %v241 = vlaneseq
    %v242 = vshrl.u32 %v241, 7
    %v243 = vsub.s32 2, %v242
    %v244 = vrot.slane %v231, %v243
    %v245 = vlaneseq
    %v246 = vshrl.u32 %v245, 7
    %v247 = vsub.s32 3, %v246
    %v248 = vrot.slane %v231, %v247
    %v249 = vlaneseq
    %v250 = vshrl.u32 %v249, 7
    %v251 = vsub.s32 4, %v250
    %v252 = vrot.slane %v231, %v251
    %v253 = vlaneseq
    %v254 = vshrl.u32 %v253, 7
    %v255 = vsub.s32 5, %v254
    %v256 = vrot.slane %v231, %v255
    %v257 = vlaneseq
    %v258 = vshrl.u32 %v257, 7
    %v259 = vsub.s32 6, %v258
    %v260 = vrot.slane %v231, %v259
    %v261 = vlaneseq
    %v262 = vshrl.u32 %v261, 7
    %v263 = vsub.s32 7, %v262
    %v264 = vrot.slane %v231, %v263
    %v273 = vsub.f32 %v149, %v236
    %v274 = vsub.f32 %v152, %v240
    %v275 = vsub.f32 %v155, %v244
    %v276 = vsub.f32 %v158, %v248
    %v277 = vsub.f32 %v161, %v252
    %v278 = vsub.f32 %v164, %v256
    %v279 = vsub.f32 %v167, %v260
    %v280 = vsub.f32 %v170, %v264
    %v281 = vmul.f32 %v273, 1.442695
    %v282 = vpow.pop %v281
    %v283 = vmul.f32 %v274, 1.442695
    %v284 = vpow.pop %v283
    %v285 = vmul.f32 %v275, 1.442695
    %v286 = vpow.pop %v285
    %v287 = vmul.f32 %v276, 1.442695
    %v288 = vpow.pop %v287
    %v289 = vmul.f32 %v277, 1.442695
    %v290 = vpow.pop %v289
    %v291 = vmul.f32 %v278, 1.442695
    %v292 = vpow.pop %v291
    %v293 = vmul.f32 %v279, 1.442695
    %v294 = vpow.pop %v293
    %v295 = vmul.f32 %v280, 1.442695
    %v296 = vpow.pop %v295
    %305 = vset.pattern.permute.xlu0 0
    %306 = vperm.xlu0 %305, %v282
    %v307 = vpop.permute.xlu0 %306
    %308 = vset.pattern.permute.xlu0 0
    %309 = vperm.xlu0 %308, %v284
    %v310 = vpop.permute.xlu0 %309
    %311 = vset.pattern.permute.xlu0 0
    %312 = vperm.xlu0 %311, %v286
    %v313 = vpop.permute.xlu0 %312
    %314 = vset.pattern.permute.xlu0 0
    %315 = vperm.xlu0 %314, %v288
    %v316 = vpop.permute.xlu0 %315
    %317 = vset.pattern.permute.xlu0 0
    %318 = vperm.xlu0 %317, %v290
    %v319 = vpop.permute.xlu0 %318
    %320 = vset.pattern.permute.xlu0 0
    %321 = vperm.xlu0 %320, %v292
    %v322 = vpop.permute.xlu0 %321
    %323 = vset.pattern.permute.xlu0 0
    %324 = vperm.xlu0 %323, %v294
    %v325 = vpop.permute.xlu0 %324
    %326 = vset.pattern.permute.xlu0 0
    %327 = vperm.xlu0 %326, %v296
    %v328 = vpop.permute.xlu0 %327
    %v329 = vlaneseq
    %v330 = vshrl.u32 %v329, 7
    %v331 = vsub.s32 %v180, %v330
    %v332 = vrot.slane %v307, %v331
    %v333 = vlaneseq
    %v334 = vshrl.u32 %v333, 7
    %v335 = vsub.s32 %v180, %v334
    %v336 = vrot.slane %v310, %v335
    %v337 = vlaneseq
    %v338 = vshrl.u32 %v337, 7
    %v339 = vsub.s32 %v180, %v338
    %v340 = vrot.slane %v313, %v339
    %v341 = vlaneseq
    %v342 = vshrl.u32 %v341, 7
    %v343 = vsub.s32 %v180, %v342
    %v344 = vrot.slane %v316, %v343
    %v345 = vlaneseq
    %v346 = vshrl.u32 %v345, 7
    %v347 = vsub.s32 %v180, %v346
    %v348 = vrot.slane %v319, %v347
    %v349 = vlaneseq
    %v350 = vshrl.u32 %v349, 7
    %v351 = vsub.s32 %v180, %v350
    %v352 = vrot.slane %v322, %v351
    %v353 = vlaneseq
    %v354 = vshrl.u32 %v353, 7
    %v355 = vsub.s32 %v180, %v354
    %v356 = vrot.slane %v325, %v355
    %v357 = vlaneseq
    %v358 = vshrl.u32 %v357, 7
    %v359 = vsub.s32 %v180, %v358
    %v360 = vrot.slane %v328, %v359
    %v361 = vsel %vm213, %v336, %v332
    %v362 = vsel %vm215, %v340, %v361
    %v363 = vsel %vm217, %v344, %v362
    %v364 = vsel %vm219, %v348, %v363
    %v365 = vsel %vm221, %v352, %v364
    %v366 = vsel %vm223, %v356, %v365
    %v367 = vsel %vm225, %v360, %v366
    %v369 = vsel %vm228, %v367, 0.0
    %370 = vadd.xlane.f32.xlu0 %v369
    %v371 = vpop.xlane.xlu0 %370
    %v372 = vrcp.pop %v371
    %v374 = vlaneseq
    %v375 = vshrl.u32 %v374, 7
    %v376 = vsub.s32 0, %v375
    %v377 = vrot.slane %v372, %v376
    %v378 = vlaneseq
    %v379 = vshrl.u32 %v378, 7
    %v380 = vsub.s32 1, %v379
    %v381 = vrot.slane %v372, %v380
    %v382 = vlaneseq
    %v383 = vshrl.u32 %v382, 7
    %v384 = vsub.s32 2, %v383
    %v385 = vrot.slane %v372, %v384
    %v386 = vlaneseq
    %v387 = vshrl.u32 %v386, 7
    %v388 = vsub.s32 3, %v387
    %v389 = vrot.slane %v372, %v388
    %v390 = vlaneseq
    %v391 = vshrl.u32 %v390, 7
    %v392 = vsub.s32 4, %v391
    %v393 = vrot.slane %v372, %v392
    %v394 = vlaneseq
    %v395 = vshrl.u32 %v394, 7
    %v396 = vsub.s32 5, %v395
    %v397 = vrot.slane %v372, %v396
    %v398 = vlaneseq
    %v399 = vshrl.u32 %v398, 7
    %v400 = vsub.s32 6, %v399
    %v401 = vrot.slane %v372, %v400
    %v402 = vlaneseq
    %v403 = vshrl.u32 %v402, 7
    %v404 = vsub.s32 7, %v403
    %v405 = vrot.slane %v372, %v404
    %v414 = vmul.f32 %v282, %v377
    %v415 = vmul.f32 %v284, %v381
    %v416 = vmul.f32 %v286, %v385
    %v417 = vmul.f32 %v288, %v389
    %v418 = vmul.f32 %v290, %v393
    %v419 = vmul.f32 %v292, %v397
    %v420 = vmul.f32 %v294, %v401
    %v421 = vmul.f32 %v296, %v405
    %430 = vset.pattern.permute.xlu0 0
    %431 = vperm.xlu0 %430, %v414
    %v432 = vpop.permute.xlu0 %431
    %433 = vset.pattern.permute.xlu0 0
    %434 = vperm.xlu0 %433, %v415
    %v435 = vpop.permute.xlu0 %434
    %436 = vset.pattern.permute.xlu0 0
    %437 = vperm.xlu0 %436, %v416
    %v438 = vpop.permute.xlu0 %437
    %439 = vset.pattern.permute.xlu0 0
    %440 = vperm.xlu0 %439, %v417
    %v441 = vpop.permute.xlu0 %440
    %442 = vset.pattern.permute.xlu0 0
    %443 = vperm.xlu0 %442, %v418
    %v444 = vpop.permute.xlu0 %443
    %445 = vset.pattern.permute.xlu0 0
    %446 = vperm.xlu0 %445, %v419
    %v447 = vpop.permute.xlu0 %446
    %448 = vset.pattern.permute.xlu0 0
    %449 = vperm.xlu0 %448, %v420
    %v450 = vpop.permute.xlu0 %449
    %451 = vset.pattern.permute.xlu0 0
    %452 = vperm.xlu0 %451, %v421
    %v453 = vpop.permute.xlu0 %452
    %v454 = vlaneseq
    %v455 = vshrl.u32 %v454, 7
    %v456 = vsub.s32 %v180, %v455
    %v457 = vrot.slane %v432, %v456
    %v458 = vlaneseq
    %v459 = vshrl.u32 %v458, 7
    %v460 = vsub.s32 %v180, %v459
    %v461 = vrot.slane %v435, %v460
    %v462 = vlaneseq
    %v463 = vshrl.u32 %v462, 7
    %v464 = vsub.s32 %v180, %v463
    %v465 = vrot.slane %v438, %v464
    %v466 = vlaneseq
    %v467 = vshrl.u32 %v466, 7
    %v468 = vsub.s32 %v180, %v467
    %v469 = vrot.slane %v441, %v468
    %v470 = vlaneseq
    %v471 = vshrl.u32 %v470, 7
    %v472 = vsub.s32 %v180, %v471
    %v473 = vrot.slane %v444, %v472
    %v474 = vlaneseq
    %v475 = vshrl.u32 %v474, 7
    %v476 = vsub.s32 %v180, %v475
    %v477 = vrot.slane %v447, %v476
    %v478 = vlaneseq
    %v479 = vshrl.u32 %v478, 7
    %v480 = vsub.s32 %v180, %v479
    %v481 = vrot.slane %v450, %v480
    %v482 = vlaneseq
    %v483 = vshrl.u32 %v482, 7
    %v484 = vsub.s32 %v180, %v483
    %v485 = vrot.slane %v453, %v484
    %v486 = vsel %vm213, %v461, %v457
    %v487 = vsel %vm215, %v465, %v486
    %v488 = vsel %vm217, %v469, %v487
    %v489 = vsel %vm219, %v473, %v488
    %v490 = vsel %vm221, %v477, %v489
    %v491 = vsel %vm223, %v481, %v490
    %v492 = vsel %vm225, %v485, %v491
    %494 = vst.msk [vmem:[#allocation7] sm:$0xff] %vm228, %v492
    // Predicated region
    $region18: #{tpu_custom_call.1} parent=1 // pred_check
      _
    $region19: #{tpu_custom_call.1} parent=1 // pred_check_branch
      %496 = sbr.rel (0) target = $region21
    $region20: #{tpu_custom_call.1} parent=1 // pred_region
      %s498 = ssub.s32 128, 128
      %499 = vsyncadd [#allocation4], %s498
      %s501 = sshll.u32 [#allocation7], 4
      %s502 = int_to_ptr.vmem [resolvable:$true] %s501
      %504 = dma.vmem_to_hbm [thread:$0]  %s502, 128, %s2, [#allocation4]
    $region21: #{tpu_custom_call.1} parent=1 // pred_fallthru
      _
    // Predicated region
    $region22: #{tpu_custom_call.1} parent=1 // pred_check
      _
    $region23: #{tpu_custom_call.1} parent=1 // pred_check_branch
      %506 = sbr.rel (0) target = $region25
    $region24: #{tpu_custom_call.1} parent=1 // pred_region
      %507 = dma.done [#allocation4], 128
    $region25: #{tpu_custom_call.1} parent=1 // pred_fallthru
      _
    %508 = vsyncpa [#allocation3], 1
    %509 = vsyncpa [#allocation6], 1
    %510 = vsyncpa [#allocation4], 1

</llo_original>
